<compile_context>
chip_gen: v7x
topology: tpu7x:2x2x1
jax: 0.10.0
libtpu: 0.0.40
codegen_flags: <defaults>
</compile_context>

<pallas_src>
import jax
import jax.numpy as jnp
from jax.experimental import pallas as pl
from jax.experimental.pallas import tpu as pltpu


def _make_cutouts_kernel(xw_ref, noise_ref, facs_ref, out_ref):
    # xw_ref   : [K, F]     pooling-window planes, F = C*cs*cs (lane-dense)
    # noise_ref: [cutn, F]  per-cutout gaussian noise
    # facs_ref : [cutn, 1]  per-cutout uniform(0, noise_fac)
    # out_ref  : [cutn, F]
    xw = xw_ref[...].astype(jnp.float32)
    pooled = (jnp.mean(xw, axis=0, keepdims=True)
              + jnp.max(xw, axis=0, keepdims=True)) * 0.5          # [1, F]
    noise = noise_ref[...].astype(jnp.float32)                     # [cutn, F]
    facs = facs_ref[...].astype(jnp.float32)                       # [cutn, 1]
    out_ref[...] = (pooled + facs * noise).astype(out_ref.dtype)


def make_cutouts(x, noise, facs, *, cut_size):
    """x: [1, C, H, W]; noise: [cutn, C, cs, cs]; facs: [cutn] -> [cutn, C, cs, cs]."""
    N, C, H, W = x.shape
    assert N == 1, "original module's broadcasting only works for batch=1"
    cs = cut_size
    assert H % cs == 0 and W % cs == 0
    kh, kw = H // cs, W // cs
    K = kh * kw
    F = C * cs * cs
    cutn = noise.shape[0]

    # glue: expose each pooling-window offset as a leading plane, then flatten
    # the trailing dims so the kernel works on lane-dense 2D blocks.
    xw = (x[0]
          .reshape(C, cs, kh, cs, kw)
          .transpose(2, 4, 0, 1, 3)
          .reshape(K, F))
    noise2d = noise.reshape(cutn, F)
    facs2d = facs.reshape(cutn, 1)

    out2d = pl.pallas_call(
        _make_cutouts_kernel,
        out_shape=jax.ShapeDtypeStruct((cutn, F), x.dtype),
        grid=(1,),  # whole problem in one step: a few KiB, easily fits VMEM
        in_specs=[
            pl.BlockSpec((K, F), lambda i: (0, 0)),        # pooling windows
            pl.BlockSpec((cutn, F), lambda i: (0, 0)),     # noise
            pl.BlockSpec((cutn, 1), lambda i: (0, 0)),     # facs (VMEM, vectorized)
        ],
        out_specs=pl.BlockSpec((cutn, F), lambda i: (0, 0)),
    )(xw, noise2d, facs2d)

    return out2d.reshape(cutn, C, cs, cs)


if __name__ == "__main__":
    # Module hyper-params (cut_pow is unused by forward()).
    cut_size, cutn, cut_pow = 8, 16, 1.0
    noise_fac = 0.1
    N, C, H, W = 1, 3, 16, 16

    key = jax.random.PRNGKey(0)
    kx, kn, kf = jax.random.split(key, 3)
    x = jax.random.uniform(kx, (N, C, H, W), dtype=jnp.float32)
    # torch's .uniform_ / randn_like RNG reproduced deterministically with jax.random.
    noise = jax.random.normal(kn, (cutn, C, cut_size, cut_size), dtype=jnp.float32)
    facs = jax.random.uniform(kf, (cutn,), dtype=jnp.float32,
                              minval=0.0, maxval=noise_fac)

    out = make_cutouts(x, noise, facs, cut_size=cut_size)
    out = jax.block_until_ready(out)

    # Pure-JAX reference check (same pooling + noise math).
    kh, kw = H // cut_size, W // cut_size
    xr = x[0].reshape(C, cut_size, kh, cut_size, kw)
    pooled = (xr.mean(axis=(2, 4)) + xr.max(axis=(2, 4))) * 0.5
    ref = pooled[None] + facs[:, None, None, None] * noise

    assert out.shape == (cutn, C, cut_size, cut_size)
    assert out.dtype == jnp.float32
    assert jnp.allclose(out, ref, atol=1e-5, rtol=1e-5)
    print("KERNEL_OK")
</pallas_src>

<mosaic_0001>
module attributes {stable_mosaic.version = 11 : i64} {
  func.func @_make_cutouts_kernel(%arg0: i32, %arg1: memref<4x192xf32, #tpu.memory_space<vmem>>, %arg2: memref<16x192xf32, #tpu.memory_space<vmem>>, %arg3: memref<16x1xf32, #tpu.memory_space<vmem>>, %arg4: memref<16x192xf32, #tpu.memory_space<vmem>>) attributes {dimension_semantics = [#tpu.dimension_semantics<arbitrary>], iteration_bounds = array<i64: 1>, scalar_prefetch = 0 : i64, scratch_operands = 0 : i64, tpu.core_type = #tpu.core_type<tc>, window_params = [{pipeline_mode = #tpu.pipeline_mode<synchronous>, transform_indices = @transform_0, window_bounds = array<i64: 4, 192>}, {pipeline_mode = #tpu.pipeline_mode<synchronous>, transform_indices = @transform_1, window_bounds = array<i64: 16, 192>}, {pipeline_mode = #tpu.pipeline_mode<synchronous>, transform_indices = @transform_2, window_bounds = array<i64: 16, 1>}, {pipeline_mode = #tpu.pipeline_mode<synchronous>, transform_indices = @transform_3, window_bounds = array<i64: 16, 192>}]} {
    %c0 = arith.constant 0 : index
    %c0_0 = arith.constant 0 : index
    %0 = vector.load %arg1[%c0, %c0_0] : memref<4x192xf32, #tpu.memory_space<vmem>>, vector<4x192xf32>
    %cst = arith.constant dense<0.000000e+00> : vector<192xf32>
    %1 = vector.multi_reduction <add>, %0, %cst [0] : vector<4x192xf32> to vector<192xf32>
    %2 = vector.shape_cast %1 : vector<192xf32> to vector<1x192xf32>
    %cst_1 = arith.constant 4.000000e+00 : f32
    %3 = vector.broadcast %cst_1 : f32 to vector<1x192xf32>
    %4 = arith.divf %2, %3 : vector<1x192xf32>
    %cst_2 = arith.constant dense<0xFF800000> : vector<192xf32>
    %5 = vector.multi_reduction <maximumf>, %0, %cst_2 [0] : vector<4x192xf32> to vector<192xf32>
    %6 = vector.shape_cast %5 : vector<192xf32> to vector<1x192xf32>
    %7 = arith.addf %4, %6 : vector<1x192xf32>
    %cst_3 = arith.constant 5.000000e-01 : f32
    %8 = vector.broadcast %cst_3 : f32 to vector<1x192xf32>
    %9 = arith.mulf %7, %8 : vector<1x192xf32>
    %c0_4 = arith.constant 0 : index
    %c0_5 = arith.constant 0 : index
    %10 = vector.load %arg2[%c0_4, %c0_5] : memref<16x192xf32, #tpu.memory_space<vmem>>, vector<16x192xf32>
    %c0_6 = arith.constant 0 : index
    %c0_7 = arith.constant 0 : index
    %11 = vector.load %arg3[%c0_6, %c0_7] : memref<16x1xf32, #tpu.memory_space<vmem>>, vector<16x1xf32>
    %12 = vector.broadcast %11 : vector<16x1xf32> to vector<16x192xf32>
    %13 = arith.mulf %12, %10 : vector<16x192xf32>
    %14 = vector.broadcast %9 : vector<1x192xf32> to vector<16x192xf32>
    %15 = arith.addf %14, %13 : vector<16x192xf32>
    %c0_8 = arith.constant 0 : index
    %c0_9 = arith.constant 0 : index
    %16 = vector.load %arg4[%c0_8, %c0_9] : memref<16x192xf32, #tpu.memory_space<vmem>>, vector<16x192xf32>
    tpu.vector_store %arg4[%c0_8, %c0_9], %15 {strides = array<i32>} : memref<16x192xf32, #tpu.memory_space<vmem>>, vector<16x192xf32>,
    return
  }
  func.func @transform_0(%arg0: i32) -> (i32, i32) {
    %c0_i32 = arith.constant 0 : i32
    %c0_i32_0 = arith.constant 0 : i32
    %c0_i32_1 = arith.constant 0 : i32
    return %c0_i32, %c0_i32_0 : i32, i32
  }
  func.func @transform_1(%arg0: i32) -> (i32, i32) {
    %c0_i32 = arith.constant 0 : i32
    %c0_i32_0 = arith.constant 0 : i32
    %c0_i32_1 = arith.constant 0 : i32
    return %c0_i32, %c0_i32_0 : i32, i32
  }
  func.func @transform_2(%arg0: i32) -> (i32, i32) {
    %c0_i32 = arith.constant 0 : i32
    %c0_i32_0 = arith.constant 0 : i32
    %c0_i32_1 = arith.constant 0 : i32
    return %c0_i32, %c0_i32_0 : i32, i32
  }
  func.func @transform_3(%arg0: i32) -> (i32, i32) {
    %c0_i32 = arith.constant 0 : i32
    %c0_i32_0 = arith.constant 0 : i32
    %c0_i32_1 = arith.constant 0 : i32
    return %c0_i32, %c0_i32_0 : i32, i32
  }
}

</mosaic_0001>

<llo_original>
// kernel: tpu_custom_call.1
$region0: #{tpu_custom_call.1}
  #allocation0 [shape = 'u32[]', space=smem, size = 0x4, offset = 0x4, fixed_abs, tag = 'smem constant byte address 0x4 - core index']
  #allocation1 [shape = 'u32[144,128]{1,0:T(1,128)}', space=vmem, size = 0x12000, scoped, tag = 'internal scratch']
  %s0 = inlined_call_operand.vmem [shape: f32[4,192], index: 0, kind: input, shape index: {}]
  %s1 = inlined_call_operand.hbm [shape: f32[16,192], index: 1, kind: input, shape index: {}]
  %s2 = inlined_call_operand.vmem [shape: f32[16,1], index: 2, kind: input, shape index: {}]
  %s3 = inlined_call_operand.hbm [shape: f32[16,192], index: 3, kind: output, shape index: {}]
  %s4 = sld [smem:[#allocation0]]
  $region26: #{tpu_custom_call.1} parent=0
    _
  %s6 = ssub.s32 1, %s4
  %s7 = scalar_select 0, %s6, %s4
  $region1: #{tpu_custom_call.1} parent=0
    #allocation2 [shape = 'u8[16384]{0}', space=vmem, size = 0x4000, scoped, tag = 'input window, operand 1, single buffered']
    #allocation3 [shape = 's32[1]{0}', space=sflag, size = 0x4, scoped, tag = 'scoped memory for tpu_custom_call.1']
    #allocation4 [shape = 's32[1]{0}', space=sflag, size = 0x4, scoped, tag = 'scoped memory for tpu_custom_call.1']
    #allocation5 [shape = 'u8[16384]{0}', space=vmem, size = 0x4000, scoped, tag = 'output window, operand 0, single buffered']
    %8 = vsyncpa [#allocation3], 0
    %9 = vsyncpa [#allocation4], 0
    // Predicated region
    $region2: #{tpu_custom_call.1} parent=1 // pred_check
      _
    $region3: #{tpu_custom_call.1} parent=1 // pred_check_branch
      %11 = sbr.rel (0) target = $region5
    $region4: #{tpu_custom_call.1} parent=1 // pred_region
      _
    $region5: #{tpu_custom_call.1} parent=1 // pred_fallthru
      _
    // Predicated region
    $region6: #{tpu_custom_call.1} parent=1 // pred_check
      _
    $region7: #{tpu_custom_call.1} parent=1 // pred_check_branch
      %13 = sbr.rel (0) target = $region9
    $region8: #{tpu_custom_call.1} parent=1 // pred_region
      %s15 = ssub.s32 512, 512
      %16 = vsyncadd [#allocation3], %s15
      %s17 = sshll.u32 [#allocation2], 4
      %s18 = int_to_ptr.vmem [resolvable:$true] %s17
      %23 = dma.hbm_to_vmem [thread:$0]  %s1, 512, %s18, [#allocation3], 256, 256, 16
    $region9: #{tpu_custom_call.1} parent=1 // pred_fallthru
      _
    // Predicated region
    $region10: #{tpu_custom_call.1} parent=1 // pred_check
      _
    $region11: #{tpu_custom_call.1} parent=1 // pred_check_branch
      %25 = sbr.rel (0) target = $region13
    $region12: #{tpu_custom_call.1} parent=1 // pred_region
      _
    $region13: #{tpu_custom_call.1} parent=1 // pred_fallthru
      _
    // Predicated region
    $region14: #{tpu_custom_call.1} parent=1 // pred_check
      _
    $region15: #{tpu_custom_call.1} parent=1 // pred_check_branch
      %27 = sbr.rel (0) target = $region17
    $region16: #{tpu_custom_call.1} parent=1 // pred_region
      %28 = dma.done [#allocation3], 512
    $region17: #{tpu_custom_call.1} parent=1 // pred_fallthru
      _
    %v29 = vld [vmem:[%s0] sm:$0xff]
    %v31 = vcombine.high %v29, %v29
    %vm33 = vcmask 1043456
    %v34 = vsel %vm33, %v29, 0.0
    %v35 = vrot.slane %v34, 4
    %v36 = vadd.f32 %v34, %v35
    %v37 = vrot.slane %v36, 2
    %v38 = vadd.f32 %v36, %v37
    %v39 = vrot.slane %v38, 1
    %v40 = vadd.f32 %v38, %v39
    %vm41 = vcmask 519168
    %v42 = vsel %vm41, %v31, 0.0
    %v43 = vrot.slane %v42, 4
    %v44 = vadd.f32 %v42, %v43
    %v45 = vrot.slane %v44, 2
    %v46 = vadd.f32 %v44, %v45
    %v47 = vrot.slane %v46, 1
    %v48 = vadd.f32 %v46, %v47
    %v49 = vrcp.pop 4.0
    %v50 = vmul.f32 %v40, %v49
    %v51 = vmul.f32 %v48, %v49
    %v52 = vsel %vm33, %v29, -inf
    %v53 = vrot.slane %v52, 4
    %v54 = vmax.f32 %v52, %v53
    %v55 = vrot.slane %v54, 2
    %v56 = vmax.f32 %v54, %v55
    %v57 = vrot.slane %v56, 1
    %v58 = vmax.f32 %v56, %v57
    %v59 = vsel %vm41, %v31, -inf
    %v60 = vrot.slane %v59, 4
    %v61 = vmax.f32 %v59, %v60
    %v62 = vrot.slane %v61, 2
    %v63 = vmax.f32 %v61, %v62
    %v64 = vrot.slane %v63, 1
    %v65 = vmax.f32 %v63, %v64
    %v66 = vadd.f32 %v50, %v58
    %v67 = vadd.f32 %v51, %v65
    %v68 = vmul.f32 %v66, 0.5
    %v69 = vmul.f32 %v67, 0.5
    %v70 = vld [vmem:[#allocation2] sm:$0xff]
    %v71 = vld [vmem:[#allocation2 + $0x8] sm:$0xff]
    %v72 = vld [vmem:[#allocation2 + $0x10] sm:$0xff]
    %v73 = vld [vmem:[#allocation2 + $0x18] sm:$0xff]
    %v74 = vld [vmem:[%s2] sm:$0xff]
    %v75 = vld [vmem:[%s2 + $0x8] sm:$0xff]
    %77 = vset.pattern.permute.xlu0 0
    %78 = vperm.xlu0 %77, %v74
    %v79 = vpop.permute.xlu0 %78
    %82 = vset.pattern.permute.xlu0 0
    %83 = vperm.xlu0 %82, %v75
    %v84 = vpop.permute.xlu0 %83
    %v86 = vmul.f32 %v79, %v70
    %v87 = vmul.f32 %v79, %v71
    %v88 = vmul.f32 %v84, %v72
    %v89 = vmul.f32 %v84, %v73
    %v90 = vadd.f32 %v68, %v86
    %v91 = vadd.f32 %v69, %v87
    %v92 = vadd.f32 %v68, %v88
    %v93 = vadd.f32 %v69, %v89
    %94 = vst [vmem:[#allocation5] sm:$0xff] %v90
    %vm95 = vcmask 523264
    %96 = vst.msk [vmem:[#allocation5 + $0x8] sm:$0xff] %vm95, %v91
    %97 = vst [vmem:[#allocation5 + $0x10] sm:$0xff] %v92
    %98 = vst.msk [vmem:[#allocation5 + $0x18] sm:$0xff] %vm95, %v93
    // Predicated region
    $region18: #{tpu_custom_call.1} parent=1 // pred_check
      _
    $region19: #{tpu_custom_call.1} parent=1 // pred_check_branch
      %100 = sbr.rel (0) target = $region21
    $region20: #{tpu_custom_call.1} parent=1 // pred_region
      %s102 = ssub.s32 512, 512
      %103 = vsyncadd [#allocation4], %s102
      %s104 = sshll.u32 [#allocation5], 4
      %s105 = int_to_ptr.vmem [resolvable:$true] %s104
      %110 = dma.vmem_to_hbm [thread:$0]  %s105, 512, %s3, [#allocation4], 256, 256, 16
    $region21: #{tpu_custom_call.1} parent=1 // pred_fallthru
      _
    // Predicated region
    $region22: #{tpu_custom_call.1} parent=1 // pred_check
      _
    $region23: #{tpu_custom_call.1} parent=1 // pred_check_branch
      %112 = sbr.rel (0) target = $region25
    $region24: #{tpu_custom_call.1} parent=1 // pred_region
      %113 = dma.done [#allocation4], 512
    $region25: #{tpu_custom_call.1} parent=1 // pred_fallthru
      _
    %114 = vsyncpa [#allocation3], 1
    %115 = vsyncpa [#allocation4], 1

</llo_original>
